<compile_context>
chip_gen: v6e
topology: v6e:2x2x1
jax: 0.10.0
libtpu: 0.0.40
codegen_flags: <defaults>
</compile_context>

<pallas_src>
import math

import jax
import jax.numpy as jnp
from jax.experimental import pallas as pl
from jax.experimental.pallas import tpu as pltpu

LANE = 128  # TPU lane width — keep the kernel output lane-dense.


# ----------------------------- Pallas kernel ------------------------------- #

def fused_gru_fc_kernel(x_ref, wr_ref, wz_ref, wn_ref,
                        br_ref, bz_ref, bn_ref, bnh_ref,
                        wfc_ref, bfc_ref, o_ref):
    """Fused last-step GRU gate + FC head.

    x_ref      : (TM, D_in)   last-timestep rows
    wr/wz/wn   : (D_in, H)    per-gate x2h weights (one MXU output per gate,
                              so no 32-lane slicing inside a 128-lane vreg)
    br/bz      : (1, H)       folded bias  bx + bh + bg   (reset / update)
    bn         : (1, H)       folded bias  bx + bg        (new gate, input side)
    bnh        : (1, H)       h2h bias of the new gate (scaled by reset gate)
    wfc        : (H, LANE_C)  FC weight, zero-padded to a multiple of 128 lanes
    bfc        : (1, LANE_C)  FC bias, zero-padded
    o_ref      : (TM, LANE_C) padded logits (lane-dense, unmasked stores)
    """
    x = x_ref[...]
    reset_gate = jax.nn.sigmoid(
        jnp.dot(x, wr_ref[...], preferred_element_type=jnp.float32)
        + br_ref[...])
    update_gate = jax.nn.sigmoid(
        jnp.dot(x, wz_ref[...], preferred_element_type=jnp.float32)
        + bz_ref[...])
    new_gate = jnp.tanh(
        jnp.dot(x, wn_ref[...], preferred_element_type=jnp.float32)
        + bn_ref[...] + reset_gate * bnh_ref[...])
    # hy = new + update * (h - new)  with h == 0  ->  new * (1 - update)
    hy = new_gate * (1.0 - update_gate)
    logits = jnp.dot(hy, wfc_ref[...], preferred_element_type=jnp.float32)
    o_ref[...] = (logits + bfc_ref[...]).astype(o_ref.dtype)


# ------------------------------- wrapper ----------------------------------- #

def _round_up(a, b):
    return (a + b - 1) // b * b


def rnn_forward(x, params):
    """x: (B, S, D_in) float32  ->  logits (B, num_classes) float32."""
    B, S, D_in = x.shape
    H = params["wh"].shape[0]
    C = params["wfc"].shape[1]
    lane_c = _round_up(C, LANE)

    # Only the last timestep reaches the FC (h0 == 0, no recurrence).
    x_last = x[:, -1, :]                                   # (B, D_in)

    # h == 0  =>  h @ wh == 0, gate_h == bh.  Fold biases per gate and split
    # wx into three per-gate matrices (lane-aligned gate outputs, no slicing
    # of the 3H axis inside the kernel).  wh itself is dead and never loaded.
    wx, bx = params["wx"], params["bx"]
    bh, bg = params["bh"], params["bg"]
    w_r, w_z, w_n = wx[:, 0:H], wx[:, H:2 * H], wx[:, 2 * H:3 * H]
    b_r = bx[:, 0:H] + bh[:, 0:H] + bg[:, 0:H]
    b_z = bx[:, H:2 * H] + bh[:, H:2 * H] + bg[:, H:2 * H]
    b_n = bx[:, 2 * H:3 * H] + bg[:, 2 * H:3 * H]
    b_nh = bh[:, 2 * H:3 * H]

    # Lane-dense output: pad FC out-dim to a multiple of 128 lanes.
    wfc = jnp.pad(params["wfc"], ((0, 0), (0, lane_c - C)))
    bfc = jnp.pad(params["bfc"], ((0, 0), (0, lane_c - C)))

    # Row grid with double-buffering; "parallel" shards rows across the two
    # TensorCores on v7x (harmless elsewhere).  TM is a multiple of 8 and
    # bounded so VMEM stays tiny even for big batches.
    TM = 256
    if B < TM:
        TM = max(8, _round_up(B, 8))
    B_pad = _round_up(B, TM)
    if B_pad != B:
        x_last = jnp.pad(x_last, ((0, B_pad - B), (0, 0)))

    rep = lambda shape: pl.BlockSpec(shape, lambda i: (0, 0))  # replicated

    out = pl.pallas_call(
        fused_gru_fc_kernel,
        out_shape=jax.ShapeDtypeStruct((B_pad, lane_c), jnp.float32),
        grid=(B_pad // TM,),
        in_specs=[
            pl.BlockSpec((TM, D_in), lambda i: (i, 0)),   # x rows (tiled)
            rep((D_in, H)), rep((D_in, H)), rep((D_in, H)),
            rep((1, H)), rep((1, H)), rep((1, H)), rep((1, H)),
            rep((H, lane_c)), rep((1, lane_c)),
        ],
        out_specs=pl.BlockSpec((TM, lane_c), lambda i: (i, 0)),
        compiler_params=pltpu.CompilerParams(
            dimension_semantics=("parallel",)),
    )(x_last, w_r, w_z, w_n, b_r, b_z, b_n, b_nh, wfc, bfc)

    return out[:B, :C]


def init_params(key, input_size, hidden_size, num_classes):
    """Deterministic init mirroring GRUCell.reset_parameters / nn.Linear."""
    std_gru = 1.0 / math.sqrt(hidden_size)
    std_fc = 1.0 / math.sqrt(hidden_size)
    ks = jax.random.split(key, 7)
    u = lambda k, shape, s: jax.random.uniform(
        k, shape, dtype=jnp.float32, minval=-s, maxval=s)
    return {
        # stored as (in, out) == PyTorch weight.T
        "wx": u(ks[0], (input_size, 3 * hidden_size), std_gru),
        "bx": u(ks[1], (1, 3 * hidden_size), std_gru),
        "wh": u(ks[2], (hidden_size, 3 * hidden_size), std_gru),  # unused: h0==0
        "bh": u(ks[3], (1, 3 * hidden_size), std_gru),
        "bg": u(ks[4], (1, 3 * hidden_size), std_gru),   # GRUCell self.bias
        "wfc": u(ks[5], (hidden_size, num_classes), std_fc),
        "bfc": u(ks[6], (1, num_classes), std_fc),
    }


if __name__ == "__main__":
    # MNIST-style: 28 time steps of 28 features; small batch and hidden.
    batch, seq_len, input_size = 2, 28, 28
    hidden_size, num_classes = 32, 10

    key = jax.random.PRNGKey(0)
    k_x, k_p = jax.random.split(key)
    x = jax.random.normal(k_x, (batch, seq_len, input_size), dtype=jnp.float32)
    params = init_params(k_p, input_size, hidden_size, num_classes)

    logits = jax.jit(rnn_forward)(x, params)
    jax.block_until_ready(logits)
    assert logits.shape == (batch, num_classes)
    assert bool(jnp.all(jnp.isfinite(logits)))
    print("KERNEL_OK")
</pallas_src>

<mosaic_0001>
module attributes {stable_mosaic.version = 11 : i64} {
  func.func @fused_gru_fc_kernel(%arg0: i32, %arg1: memref<8x28xf32, #tpu.memory_space<vmem>>, %arg2: memref<28x32xf32, #tpu.memory_space<vmem>>, %arg3: memref<28x32xf32, #tpu.memory_space<vmem>>, %arg4: memref<28x32xf32, #tpu.memory_space<vmem>>, %arg5: memref<1x32xf32, #tpu.memory_space<vmem>>, %arg6: memref<1x32xf32, #tpu.memory_space<vmem>>, %arg7: memref<1x32xf32, #tpu.memory_space<vmem>>, %arg8: memref<1x32xf32, #tpu.memory_space<vmem>>, %arg9: memref<32x128xf32, #tpu.memory_space<vmem>>, %arg10: memref<1x128xf32, #tpu.memory_space<vmem>>, %arg11: memref<8x128xf32, #tpu.memory_space<vmem>>) attributes {dimension_semantics = [#tpu.dimension_semantics<parallel>], iteration_bounds = array<i64: 1>, scalar_prefetch = 0 : i64, scratch_operands = 0 : i64, tpu.core_type = #tpu.core_type<tc>, window_params = [{transform_indices = @transform_0, window_bounds = array<i64: 8, 28>}, {pipeline_mode = #tpu.pipeline_mode<synchronous>, transform_indices = @transform_1, window_bounds = array<i64: 28, 32>}, {pipeline_mode = #tpu.pipeline_mode<synchronous>, transform_indices = @transform_2, window_bounds = array<i64: 28, 32>}, {pipeline_mode = #tpu.pipeline_mode<synchronous>, transform_indices = @transform_3, window_bounds = array<i64: 28, 32>}, {pipeline_mode = #tpu.pipeline_mode<synchronous>, transform_indices = @transform_4, window_bounds = array<i64: 1, 32>}, {pipeline_mode = #tpu.pipeline_mode<synchronous>, transform_indices = @transform_5, window_bounds = array<i64: 1, 32>}, {pipeline_mode = #tpu.pipeline_mode<synchronous>, transform_indices = @transform_6, window_bounds = array<i64: 1, 32>}, {pipeline_mode = #tpu.pipeline_mode<synchronous>, transform_indices = @transform_7, window_bounds = array<i64: 1, 32>}, {pipeline_mode = #tpu.pipeline_mode<synchronous>, transform_indices = @transform_8, window_bounds = array<i64: 32, 128>}, {pipeline_mode = #tpu.pipeline_mode<synchronous>, transform_indices = @transform_9, window_bounds = array<i64: 1, 128>}, {transform_indices = @transform_10, window_bounds = array<i64: 8, 128>}]} {
    %c0 = arith.constant 0 : index
    %c0_0 = arith.constant 0 : index
    %0 = vector.load %arg1[%c0, %c0_0] : memref<8x28xf32, #tpu.memory_space<vmem>>, vector<8x28xf32>
    %c0_1 = arith.constant 0 : index
    %c0_2 = arith.constant 0 : index
    %1 = vector.load %arg2[%c0_1, %c0_2] : memref<28x32xf32, #tpu.memory_space<vmem>>, vector<28x32xf32>
    %cst = arith.constant dense<0.000000e+00> : vector<8x32xf32>
    %2 = tpu.matmul %0, %1, %cst {dimension_numbers = #tpu.dot_dimension_numbers<[1], [0], [0], [1], [0, 0, 1, 1], [], []>} : vector<8x28xf32>, vector<28x32xf32>, vector<8x32xf32> -> vector<8x32xf32>
    %c0_3 = arith.constant 0 : index
    %c0_4 = arith.constant 0 : index
    %3 = vector.load %arg5[%c0_3, %c0_4] : memref<1x32xf32, #tpu.memory_space<vmem>>, vector<1x32xf32>
    %4 = vector.broadcast %3 : vector<1x32xf32> to vector<8x32xf32>
    %5 = arith.addf %2, %4 : vector<8x32xf32>
    %6 = arith.negf %5 : vector<8x32xf32>
    %7 = math.exp %6 : vector<8x32xf32>
    %cst_5 = arith.constant 1.000000e+00 : f32
    %8 = vector.broadcast %cst_5 : f32 to vector<8x32xf32>
    %9 = arith.addf %8, %7 : vector<8x32xf32>
    %10 = arith.divf %8, %9 : vector<8x32xf32>
    %c0_6 = arith.constant 0 : index
    %c0_7 = arith.constant 0 : index
    %11 = vector.load %arg3[%c0_6, %c0_7] : memref<28x32xf32, #tpu.memory_space<vmem>>, vector<28x32xf32>
    %cst_8 = arith.constant dense<0.000000e+00> : vector<8x32xf32>
    %12 = tpu.matmul %0, %11, %cst_8 {dimension_numbers = #tpu.dot_dimension_numbers<[1], [0], [0], [1], [0, 0, 1, 1], [], []>} : vector<8x28xf32>, vector<28x32xf32>, vector<8x32xf32> -> vector<8x32xf32>
    %c0_9 = arith.constant 0 : index
    %c0_10 = arith.constant 0 : index
    %13 = vector.load %arg6[%c0_9, %c0_10] : memref<1x32xf32, #tpu.memory_space<vmem>>, vector<1x32xf32>
    %14 = vector.broadcast %13 : vector<1x32xf32> to vector<8x32xf32>
    %15 = arith.addf %12, %14 : vector<8x32xf32>
    %16 = arith.negf %15 : vector<8x32xf32>
    %17 = math.exp %16 : vector<8x32xf32>
    %cst_11 = arith.constant 1.000000e+00 : f32
    %18 = vector.broadcast %cst_11 : f32 to vector<8x32xf32>
    %19 = arith.addf %18, %17 : vector<8x32xf32>
    %20 = arith.divf %18, %19 : vector<8x32xf32>
    %c0_12 = arith.constant 0 : index
    %c0_13 = arith.constant 0 : index
    %21 = vector.load %arg4[%c0_12, %c0_13] : memref<28x32xf32, #tpu.memory_space<vmem>>, vector<28x32xf32>
    %cst_14 = arith.constant dense<0.000000e+00> : vector<8x32xf32>
    %22 = tpu.matmul %0, %21, %cst_14 {dimension_numbers = #tpu.dot_dimension_numbers<[1], [0], [0], [1], [0, 0, 1, 1], [], []>} : vector<8x28xf32>, vector<28x32xf32>, vector<8x32xf32> -> vector<8x32xf32>
    %c0_15 = arith.constant 0 : index
    %c0_16 = arith.constant 0 : index
    %23 = vector.load %arg7[%c0_15, %c0_16] : memref<1x32xf32, #tpu.memory_space<vmem>>, vector<1x32xf32>
    %24 = vector.broadcast %23 : vector<1x32xf32> to vector<8x32xf32>
    %25 = arith.addf %22, %24 : vector<8x32xf32>
    %c0_17 = arith.constant 0 : index
    %c0_18 = arith.constant 0 : index
    %26 = vector.load %arg8[%c0_17, %c0_18] : memref<1x32xf32, #tpu.memory_space<vmem>>, vector<1x32xf32>
    %27 = vector.broadcast %26 : vector<1x32xf32> to vector<8x32xf32>
    %28 = arith.mulf %10, %27 : vector<8x32xf32>
    %29 = arith.addf %25, %28 : vector<8x32xf32>
    %30 = math.tanh %29 : vector<8x32xf32>
    %cst_19 = arith.constant 1.000000e+00 : f32
    %31 = vector.broadcast %cst_19 : f32 to vector<8x32xf32>
    %32 = arith.subf %31, %20 : vector<8x32xf32>
    %33 = arith.mulf %30, %32 : vector<8x32xf32>
    %c0_20 = arith.constant 0 : index
    %c0_21 = arith.constant 0 : index
    %34 = vector.load %arg9[%c0_20, %c0_21] : memref<32x128xf32, #tpu.memory_space<vmem>>, vector<32x128xf32>
    %cst_22 = arith.constant dense<0.000000e+00> : vector<8x128xf32>
    %35 = tpu.matmul %33, %34, %cst_22 {dimension_numbers = #tpu.dot_dimension_numbers<[1], [0], [0], [1], [0, 0, 1, 1], [], []>} : vector<8x32xf32>, vector<32x128xf32>, vector<8x128xf32> -> vector<8x128xf32>
    %c0_23 = arith.constant 0 : index
    %c0_24 = arith.constant 0 : index
    %36 = vector.load %arg10[%c0_23, %c0_24] : memref<1x128xf32, #tpu.memory_space<vmem>>, vector<1x128xf32>
    %37 = vector.broadcast %36 : vector<1x128xf32> to vector<8x128xf32>
    %38 = arith.addf %35, %37 : vector<8x128xf32>
    %c0_25 = arith.constant 0 : index
    %c0_26 = arith.constant 0 : index
    %39 = vector.load %arg11[%c0_25, %c0_26] : memref<8x128xf32, #tpu.memory_space<vmem>>, vector<8x128xf32>
    tpu.vector_store %arg11[%c0_25, %c0_26], %38 {strides = array<i32>} : memref<8x128xf32, #tpu.memory_space<vmem>>, vector<8x128xf32>,
    return
  }
  func.func @transform_0(%arg0: i32) -> (i32, i32) {
    %c0_i32 = arith.constant 0 : i32
    %c0_i32_0 = arith.constant 0 : i32
    return %arg0, %c0_i32 : i32, i32
  }
  func.func @transform_1(%arg0: i32) -> (i32, i32) {
    %c0_i32 = arith.constant 0 : i32
    %c0_i32_0 = arith.constant 0 : i32
    %c0_i32_1 = arith.constant 0 : i32
    return %c0_i32, %c0_i32_0 : i32, i32
  }
  func.func @transform_2(%arg0: i32) -> (i32, i32) {
    %c0_i32 = arith.constant 0 : i32
    %c0_i32_0 = arith.constant 0 : i32
    %c0_i32_1 = arith.constant 0 : i32
    return %c0_i32, %c0_i32_0 : i32, i32
  }
  func.func @transform_3(%arg0: i32) -> (i32, i32) {
    %c0_i32 = arith.constant 0 : i32
    %c0_i32_0 = arith.constant 0 : i32
    %c0_i32_1 = arith.constant 0 : i32
    return %c0_i32, %c0_i32_0 : i32, i32
  }
  func.func @transform_4(%arg0: i32) -> (i32, i32) {
    %c0_i32 = arith.constant 0 : i32
    %c0_i32_0 = arith.constant 0 : i32
    %c0_i32_1 = arith.constant 0 : i32
    return %c0_i32, %c0_i32_0 : i32, i32
  }
  func.func @transform_5(%arg0: i32) -> (i32, i32) {
    %c0_i32 = arith.constant 0 : i32
    %c0_i32_0 = arith.constant 0 : i32
    %c0_i32_1 = arith.constant 0 : i32
    return %c0_i32, %c0_i32_0 : i32, i32
  }
  func.func @transform_6(%arg0: i32) -> (i32, i32) {
    %c0_i32 = arith.constant 0 : i32
    %c0_i32_0 = arith.constant 0 : i32
    %c0_i32_1 = arith.constant 0 : i32
    return %c0_i32, %c0_i32_0 : i32, i32
  }
  func.func @transform_7(%arg0: i32) -> (i32, i32) {
    %c0_i32 = arith.constant 0 : i32
    %c0_i32_0 = arith.constant 0 : i32
    %c0_i32_1 = arith.constant 0 : i32
    return %c0_i32, %c0_i32_0 : i32, i32
  }
  func.func @transform_8(%arg0: i32) -> (i32, i32) {
    %c0_i32 = arith.constant 0 : i32
    %c0_i32_0 = arith.constant 0 : i32
    %c0_i32_1 = arith.constant 0 : i32
    return %c0_i32, %c0_i32_0 : i32, i32
  }
  func.func @transform_9(%arg0: i32) -> (i32, i32) {
    %c0_i32 = arith.constant 0 : i32
    %c0_i32_0 = arith.constant 0 : i32
    %c0_i32_1 = arith.constant 0 : i32
    return %c0_i32, %c0_i32_0 : i32, i32
  }
  func.func @transform_10(%arg0: i32) -> (i32, i32) {
    %c0_i32 = arith.constant 0 : i32
    %c0_i32_0 = arith.constant 0 : i32
    return %arg0, %c0_i32 : i32, i32
  }
}

</mosaic_0001>

<llo_original>
// kernel: rnn_forward.1
$region0: #{rnn_forward.1}
  #allocation0 [shape = 'u32[]', space=smem, size = 0x4, offset = 0x4, fixed_abs, tag = 'smem constant byte address 0x4 - core index']
  #allocation1 [shape = 'u32[144,128]{1,0:T(1,128)}', space=vmem, size = 0x12000, scoped, tag = 'internal scratch']
  %s0 = inlined_call_operand.vmem [shape: f32[8,28], index: 0, kind: input, shape index: {}]
  %s1 = inlined_call_operand.vmem [shape: f32[28,32], index: 1, kind: input, shape index: {}]
  %s2 = inlined_call_operand.vmem [shape: f32[28,32], index: 2, kind: input, shape index: {}]
  %s3 = inlined_call_operand.vmem [shape: f32[28,32], index: 3, kind: input, shape index: {}]
  %s4 = inlined_call_operand.vmem [shape: f32[1,32], index: 4, kind: input, shape index: {}]
  %s5 = inlined_call_operand.vmem [shape: f32[1,32], index: 5, kind: input, shape index: {}]
  %s6 = inlined_call_operand.vmem [shape: f32[1,32], index: 6, kind: input, shape index: {}]
  %s7 = inlined_call_operand.vmem [shape: f32[1,32], index: 7, kind: input, shape index: {}]
  %s8 = inlined_call_operand.vmem [shape: f32[32,128], index: 8, kind: input, shape index: {}]
  %s9 = inlined_call_operand.vmem [shape: f32[1,128], index: 9, kind: input, shape index: {}]
  %s10 = inlined_call_operand.vmem [shape: f32[8,128], index: 10, kind: output, shape index: {}]
  %s11 = sld [smem:[#allocation0]]
  $region50: #{rnn_forward.1} parent=0
    _
  %s13 = ssub.s32 1, %s11
  %s14 = scalar_select 0, %s13, %s11
  // Predicated region
  $region2: #{rnn_forward.1} parent=0 // pred_check
    _
  $region3: #{rnn_forward.1} parent=0 // pred_check_branch
    %16 = sbr.rel (0) target = $region5
  $region4: #{rnn_forward.1} parent=0 // pred_region
    _
  $region5: #{rnn_forward.1} parent=0 // pred_fallthru
    _
  // Predicated region
  $region6: #{rnn_forward.1} parent=0 // pred_check
    _
  $region7: #{rnn_forward.1} parent=0 // pred_check_branch
    %18 = sbr.rel (0) target = $region9
  $region8: #{rnn_forward.1} parent=0 // pred_region
    _
  $region9: #{rnn_forward.1} parent=0 // pred_fallthru
    _
  // Predicated region
  $region10: #{rnn_forward.1} parent=0 // pred_check
    _
  $region11: #{rnn_forward.1} parent=0 // pred_check_branch
    %20 = sbr.rel (0) target = $region13
  $region12: #{rnn_forward.1} parent=0 // pred_region
    _
  $region13: #{rnn_forward.1} parent=0 // pred_fallthru
    _
  // Predicated region
  $region14: #{rnn_forward.1} parent=0 // pred_check
    _
  $region15: #{rnn_forward.1} parent=0 // pred_check_branch
    %22 = sbr.rel (0) target = $region17
  $region16: #{rnn_forward.1} parent=0 // pred_region
    _
  $region17: #{rnn_forward.1} parent=0 // pred_fallthru
    _
  // Predicated region
  $region18: #{rnn_forward.1} parent=0 // pred_check
    _
  $region19: #{rnn_forward.1} parent=0 // pred_check_branch
    %24 = sbr.rel (0) target = $region21
  $region20: #{rnn_forward.1} parent=0 // pred_region
    _
  $region21: #{rnn_forward.1} parent=0 // pred_fallthru
    _
  // Predicated region
  $region22: #{rnn_forward.1} parent=0 // pred_check
    _
  $region23: #{rnn_forward.1} parent=0 // pred_check_branch
    %26 = sbr.rel (0) target = $region25
  $region24: #{rnn_forward.1} parent=0 // pred_region
    _
  $region25: #{rnn_forward.1} parent=0 // pred_fallthru
    _
  // Predicated region
  $region26: #{rnn_forward.1} parent=0 // pred_check
    _
  $region27: #{rnn_forward.1} parent=0 // pred_check_branch
    %28 = sbr.rel (0) target = $region29
  $region28: #{rnn_forward.1} parent=0 // pred_region
    _
  $region29: #{rnn_forward.1} parent=0 // pred_fallthru
    _
  // Predicated region
  $region30: #{rnn_forward.1} parent=0 // pred_check
    _
  $region31: #{rnn_forward.1} parent=0 // pred_check_branch
    %30 = sbr.rel (0) target = $region33
  $region32: #{rnn_forward.1} parent=0 // pred_region
    _
  $region33: #{rnn_forward.1} parent=0 // pred_fallthru
    _
  // Predicated region
  $region34: #{rnn_forward.1} parent=0 // pred_check
    _
  $region35: #{rnn_forward.1} parent=0 // pred_check_branch
    %32 = sbr.rel (0) target = $region37
  $region36: #{rnn_forward.1} parent=0 // pred_region
    _
  $region37: #{rnn_forward.1} parent=0 // pred_fallthru
    _
  // Predicated region
  $region38: #{rnn_forward.1} parent=0 // pred_check
    _
  $region39: #{rnn_forward.1} parent=0 // pred_check_branch
    %34 = sbr.rel (0) target = $region41
  $region40: #{rnn_forward.1} parent=0 // pred_region
    _
  $region41: #{rnn_forward.1} parent=0 // pred_fallthru
    _
  %v35 = vld [vmem:[%s0] sm:$0xff]
  %v36 = vld [vmem:[%s1] sm:$0xff]
  %v37 = vld [vmem:[%s1 + $0x8] sm:$0xff]
  %v38 = vld [vmem:[%s1 + $0x10] sm:$0xff]
  %v39 = vld [vmem:[%s1 + $0x18] sm:$0xf]
  %v40 = vld [vmem:[%s4] sm:$0x1]
  %v42 = vlaneseq
  %v43 = vshrl.u32 %v42, 7
  %v44 = vsub.s32 0, %v43
  %v45 = vrot.slane %v40, %v44
  %vm47 = vcmask 228352
  %v49 = vsel %vm47, %v35, 0
  %vm51 = vcmask 1043456
  %v53 = vsel %vm51, %v39, 0
  %55 = vmatprep.subr.mxu0 0.0
  %56 = vmatpush1.msra.mxu0 0.0
  %57 = vmatprep.subr.mxu0 0.0
  %58 = vmatpush1.msra.mxu0 0.0
  %59 = vmatprep.subr.mxu0 0.0
  %60 = vmatpush1.msra.mxu0 0.0
  %61 = vmatprep.subr.mxu0 0.0
  %62 = vmatpush1.msra.mxu0 0.0
  %63 = vmatprep.subr.mxu0 0.0
  %64 = vmatpush1.msra.mxu0 0.0
  %65 = vmatprep.subr.mxu0 0.0
  %66 = vmatpush1.msra.mxu0 0.0
  %67 = vmatprep.subr.mxu0 0.0
  %68 = vmatpush1.msra.mxu0 0.0
  %69 = vmatprep.subr.mxu0 0.0
  %70 = vmatpush1.msra.mxu0 0.0
  %71 = vmatprep.subr.mxu0 0.0
  %72 = vmatpush1.msra.mxu0 0.0
  %73 = vmatprep.subr.mxu0 0.0
  %74 = vmatpush1.msra.mxu0 0.0
  %75 = vmatprep.subr.mxu0 0.0
  %76 = vmatpush1.msra.mxu0 0.0
  %77 = vmatprep.subr.mxu0 0.0
  %78 = vmatpush1.msra.mxu0 0.0
  %79 = vmatprep.subr.mxu0 0.0
  %80 = vmatpush1.msra.mxu0 %v53
  %81 = vmatprep.subr.mxu0 0.0
  %82 = vmatpush1.msra.mxu0 %v38
  %83 = vmatprep.subr.mxu0 0.0
  %84 = vmatpush1.msra.mxu0 %v37
  %85 = vmatprep.subr.mxu0 0.0
  %86 = vmatpush1.msra.mxu0 %v36
  %87 = vmatprep.subr.mxu0 0.0
  %88 = vmatpush2.msra.mxu0 0.0
  %89 = vmatprep.subr.mxu0 0.0
  %90 = vmatpush2.msra.mxu0 0.0
  %91 = vmatprep.subr.mxu0 0.0
  %92 = vmatpush2.msra.mxu0 0.0
  %93 = vmatprep.subr.mxu0 0.0
  %94 = vmatpush2.msra.mxu0 0.0
  %95 = vmatprep.subr.mxu0 0.0
  %96 = vmatpush2.msra.mxu0 0.0
  %97 = vmatprep.subr.mxu0 0.0
  %98 = vmatpush2.msra.mxu0 0.0
  %99 = vmatprep.subr.mxu0 0.0
  %100 = vmatpush2.msra.mxu0 0.0
  %101 = vmatprep.subr.mxu0 0.0
  %102 = vmatpush2.msra.mxu0 0.0
  %103 = vmatprep.subr.mxu0 0.0
  %104 = vmatpush2.msra.mxu0 0.0
  %105 = vmatprep.subr.mxu0 0.0
  %106 = vmatpush2.msra.mxu0 0.0
  %107 = vmatprep.subr.mxu0 0.0
  %108 = vmatpush2.msra.mxu0 0.0
  %109 = vmatprep.subr.mxu0 0.0
  %110 = vmatpush2.msra.mxu0 0.0
  %111 = vmatprep.subr.mxu0 0.0
  %112 = vmatpush2.msra.mxu0 0.0
  %113 = vmatprep.subr.mxu0 0.0
  %114 = vmatpush2.msra.mxu0 0.0
  %115 = vmatprep.subr.mxu0 0.0
  %116 = vmatpush2.msra.mxu0 0.0
  %117 = vmatprep.subr.mxu0 0.0
  %118 = vmatpush2.msra.mxu0 0.0
  %119 = vmatprep.mubr.f32.mxu0 0.0
  %120 = vmatmul.mubr.f32.gmra.mxu0 %v49
  %v121 = vpop.f32.mrf.mxu0
  %v122 = vadd.f32 %v45, %v121
  %v123 = vpop.f32.mrf.mxu0
  %124 = vdwg.mxu0
  %v125 = vxor.u32 %v122, 2147483648
  %v126 = vmul.f32 %v125, 1.442695
  %v127 = vpow.pop %v126
  %v128 = vadd.f32 %v127, 1.0
  %v129 = vrcp.pop %v128
  %v130 = vmul.f32 1.0, %v129
  %v131 = vld [vmem:[%s2] sm:$0xff]
  %v132 = vld [vmem:[%s2 + $0x8] sm:$0xff]
  %v133 = vld [vmem:[%s2 + $0x10] sm:$0xff]
  %v134 = vld [vmem:[%s2 + $0x18] sm:$0xf]
  %v135 = vld [vmem:[%s5] sm:$0x1]
  %v137 = vlaneseq
  %v138 = vshrl.u32 %v137, 7
  %v139 = vsub.s32 0, %v138
  %v140 = vrot.slane %v135, %v139
  %v143 = vsel %vm51, %v134, 0
  %145 = vmatprep.subr.mxu0 0.0
  %146 = vmatpush1.msra.mxu0 0.0
  %147 = vmatprep.subr.mxu0 0.0
  %148 = vmatpush1.msra.mxu0 0.0
  %149 = vmatprep.subr.mxu0 0.0
  %150 = vmatpush1.msra.mxu0 0.0
  %151 = vmatprep.subr.mxu0 0.0
  %152 = vmatpush1.msra.mxu0 0.0
  %153 = vmatprep.subr.mxu0 0.0
  %154 = vmatpush1.msra.mxu0 0.0
  %155 = vmatprep.subr.mxu0 0.0
  %156 = vmatpush1.msra.mxu0 0.0
  %157 = vmatprep.subr.mxu0 0.0
  %158 = vmatpush1.msra.mxu0 0.0
  %159 = vmatprep.subr.mxu0 0.0
  %160 = vmatpush1.msra.mxu0 0.0
  %161 = vmatprep.subr.mxu0 0.0
  %162 = vmatpush1.msra.mxu0 0.0
  %163 = vmatprep.subr.mxu0 0.0
  %164 = vmatpush1.msra.mxu0 0.0
  %165 = vmatprep.subr.mxu0 0.0
  %166 = vmatpush1.msra.mxu0 0.0
  %167 = vmatprep.subr.mxu0 0.0
  %168 = vmatpush1.msra.mxu0 0.0
  %169 = vmatprep.subr.mxu0 0.0
  %170 = vmatpush1.msra.mxu0 %v143
  %171 = vmatprep.subr.mxu0 0.0
  %172 = vmatpush1.msra.mxu0 %v133
  %173 = vmatprep.subr.mxu0 0.0
  %174 = vmatpush1.msra.mxu0 %v132
  %175 = vmatprep.subr.mxu0 0.0
  %176 = vmatpush1.msra.mxu0 %v131
  %177 = vmatprep.subr.mxu0 0.0
  %178 = vmatpush2.msra.mxu0 0.0
  %179 = vmatprep.subr.mxu0 0.0
  %180 = vmatpush2.msra.mxu0 0.0
  %181 = vmatprep.subr.mxu0 0.0
  %182 = vmatpush2.msra.mxu0 0.0
  %183 = vmatprep.subr.mxu0 0.0
  %184 = vmatpush2.msra.mxu0 0.0
  %185 = vmatprep.subr.mxu0 0.0
  %186 = vmatpush2.msra.mxu0 0.0
  %187 = vmatprep.subr.mxu0 0.0
  %188 = vmatpush2.msra.mxu0 0.0
  %189 = vmatprep.subr.mxu0 0.0
  %190 = vmatpush2.msra.mxu0 0.0
  %191 = vmatprep.subr.mxu0 0.0
  %192 = vmatpush2.msra.mxu0 0.0
  %193 = vmatprep.subr.mxu0 0.0
  %194 = vmatpush2.msra.mxu0 0.0
  %195 = vmatprep.subr.mxu0 0.0
  %196 = vmatpush2.msra.mxu0 0.0
  %197 = vmatprep.subr.mxu0 0.0
  %198 = vmatpush2.msra.mxu0 0.0
  %199 = vmatprep.subr.mxu0 0.0
  %200 = vmatpush2.msra.mxu0 0.0
  %201 = vmatprep.subr.mxu0 0.0
  %202 = vmatpush2.msra.mxu0 0.0
  %203 = vmatprep.subr.mxu0 0.0
  %204 = vmatpush2.msra.mxu0 0.0
  %205 = vmatprep.subr.mxu0 0.0
  %206 = vmatpush2.msra.mxu0 0.0
  %207 = vmatprep.subr.mxu0 0.0
  %208 = vmatpush2.msra.mxu0 0.0
  %209 = vmatprep.mubr.f32.mxu0 0.0
  %210 = vmatmul.mubr.f32.gmra.mxu0 %v49
  %v211 = vpop.f32.mrf.mxu0
  %v212 = vadd.f32 %v140, %v211
  %v213 = vpop.f32.mrf.mxu0
  %214 = vdwg.mxu0
  %v215 = vxor.u32 %v212, 2147483648
  %v216 = vmul.f32 %v215, 1.442695
  %v217 = vpow.pop %v216
  %v218 = vadd.f32 %v217, 1.0
  %v219 = vrcp.pop %v218
  %v220 = vmul.f32 1.0, %v219
  %v221 = vld [vmem:[%s3] sm:$0xff]
  %v222 = vld [vmem:[%s3 + $0x8] sm:$0xff]
  %v223 = vld [vmem:[%s3 + $0x10] sm:$0xff]
  %v224 = vld [vmem:[%s3 + $0x18] sm:$0xf]
  %v225 = vld [vmem:[%s6] sm:$0x1]
  %v227 = vlaneseq
  %v228 = vshrl.u32 %v227, 7
  %v229 = vsub.s32 0, %v228
  %v230 = vrot.slane %v225, %v229
  %v233 = vsel %vm51, %v224, 0
  %235 = vmatprep.subr.mxu0 0.0
  %236 = vmatpush1.msra.mxu0 0.0
  %237 = vmatprep.subr.mxu0 0.0
  %238 = vmatpush1.msra.mxu0 0.0
  %239 = vmatprep.subr.mxu0 0.0
  %240 = vmatpush1.msra.mxu0 0.0
  %241 = vmatprep.subr.mxu0 0.0
  %242 = vmatpush1.msra.mxu0 0.0
  %243 = vmatprep.subr.mxu0 0.0
  %244 = vmatpush1.msra.mxu0 0.0
  %245 = vmatprep.subr.mxu0 0.0
  %246 = vmatpush1.msra.mxu0 0.0
  %247 = vmatprep.subr.mxu0 0.0
  %248 = vmatpush1.msra.mxu0 0.0
  %249 = vmatprep.subr.mxu0 0.0
  %250 = vmatpush1.msra.mxu0 0.0
  %251 = vmatprep.subr.mxu0 0.0
  %252 = vmatpush1.msra.mxu0 0.0
  %253 = vmatprep.subr.mxu0 0.0
  %254 = vmatpush1.msra.mxu0 0.0
  %255 = vmatprep.subr.mxu0 0.0
  %256 = vmatpush1.msra.mxu0 0.0
  %257 = vmatprep.subr.mxu0 0.0
  %258 = vmatpush1.msra.mxu0 0.0
  %259 = vmatprep.subr.mxu0 0.0
  %260 = vmatpush1.msra.mxu0 %v233
  %261 = vmatprep.subr.mxu0 0.0
  %262 = vmatpush1.msra.mxu0 %v223
  %263 = vmatprep.subr.mxu0 0.0
  %264 = vmatpush1.msra.mxu0 %v222
  %265 = vmatprep.subr.mxu0 0.0
  %266 = vmatpush1.msra.mxu0 %v221
  %267 = vmatprep.subr.mxu0 0.0
  %268 = vmatpush2.msra.mxu0 0.0
  %269 = vmatprep.subr.mxu0 0.0
  %270 = vmatpush2.msra.mxu0 0.0
  %271 = vmatprep.subr.mxu0 0.0
  %272 = vmatpush2.msra.mxu0 0.0
  %273 = vmatprep.subr.mxu0 0.0
  %274 = vmatpush2.msra.mxu0 0.0
  %275 = vmatprep.subr.mxu0 0.0
  %276 = vmatpush2.msra.mxu0 0.0
  %277 = vmatprep.subr.mxu0 0.0
  %278 = vmatpush2.msra.mxu0 0.0
  %279 = vmatprep.subr.mxu0 0.0
  %280 = vmatpush2.msra.mxu0 0.0
  %281 = vmatprep.subr.mxu0 0.0
  %282 = vmatpush2.msra.mxu0 0.0
  %283 = vmatprep.subr.mxu0 0.0
  %284 = vmatpush2.msra.mxu0 0.0
  %285 = vmatprep.subr.mxu0 0.0
  %286 = vmatpush2.msra.mxu0 0.0
  %287 = vmatprep.subr.mxu0 0.0
  %288 = vmatpush2.msra.mxu0 0.0
  %289 = vmatprep.subr.mxu0 0.0
  %290 = vmatpush2.msra.mxu0 0.0
  %291 = vmatprep.subr.mxu0 0.0
  %292 = vmatpush2.msra.mxu0 0.0
  %293 = vmatprep.subr.mxu0 0.0
  %294 = vmatpush2.msra.mxu0 0.0
  %295 = vmatprep.subr.mxu0 0.0
  %296 = vmatpush2.msra.mxu0 0.0
  %297 = vmatprep.subr.mxu0 0.0
  %298 = vmatpush2.msra.mxu0 0.0
  %299 = vmatprep.mubr.f32.mxu0 0.0
  %300 = vmatmul.mubr.f32.gmra.mxu0 %v49
  %v301 = vpop.f32.mrf.mxu0
  %v302 = vadd.f32 %v230, %v301
  %v303 = vpop.f32.mrf.mxu0
  %304 = vdwg.mxu0
  %v305 = vld [vmem:[%s7] sm:$0x1]
  %v307 = vlaneseq
  %v308 = vshrl.u32 %v307, 7
  %v309 = vsub.s32 0, %v308
  %v310 = vrot.slane %v305, %v309
  %v312 = vmul.f32 %v130, %v310
  %v313 = vadd.f32 %v302, %v312
  %v314 = vtanh.pop %v313
  %v315 = vsub.f32 1.0, %v220
  %v316 = vmul.f32 %v314, %v315
  %v317 = vld [vmem:[%s8] sm:$0xff]
  %v318 = vld [vmem:[%s8 + $0x8] sm:$0xff]
  %v319 = vld [vmem:[%s8 + $0x10] sm:$0xff]
  %v320 = vld [vmem:[%s8 + $0x18] sm:$0xff]
  %v321 = vld [vmem:[%s9] sm:$0x1]
  %v323 = vlaneseq
  %v324 = vshrl.u32 %v323, 7
  %v325 = vsub.s32 0, %v324
  %v326 = vrot.slane %v321, %v325
  %vm328 = vcmask 261120
  %v330 = vsel %vm328, %v316, 0
  %332 = vmatprep.subr.mxu0 0.0
  %333 = vmatpush1.msra.mxu0 0.0
  %334 = vmatprep.subr.mxu0 0.0
  %335 = vmatpush1.msra.mxu0 0.0
  %336 = vmatprep.subr.mxu0 0.0
  %337 = vmatpush1.msra.mxu0 0.0
  %338 = vmatprep.subr.mxu0 0.0
  %339 = vmatpush1.msra.mxu0 0.0
  %340 = vmatprep.subr.mxu0 0.0
  %341 = vmatpush1.msra.mxu0 0.0
  %342 = vmatprep.subr.mxu0 0.0
  %343 = vmatpush1.msra.mxu0 0.0
  %344 = vmatprep.subr.mxu0 0.0
  %345 = vmatpush1.msra.mxu0 0.0
  %346 = vmatprep.subr.mxu0 0.0
  %347 = vmatpush1.msra.mxu0 0.0
  %348 = vmatprep.subr.mxu0 0.0
  %349 = vmatpush1.msra.mxu0 0.0
  %350 = vmatprep.subr.mxu0 0.0
  %351 = vmatpush1.msra.mxu0 0.0
  %352 = vmatprep.subr.mxu0 0.0
  %353 = vmatpush1.msra.mxu0 0.0
  %354 = vmatprep.subr.mxu0 0.0
  %355 = vmatpush1.msra.mxu0 0.0
  %356 = vmatprep.subr.mxu0 0.0
  %357 = vmatpush1.msra.mxu0 %v320
  %358 = vmatprep.subr.mxu0 0.0
  %359 = vmatpush1.msra.mxu0 %v319
  %360 = vmatprep.subr.mxu0 0.0
  %361 = vmatpush1.msra.mxu0 %v318
  %362 = vmatprep.subr.mxu0 0.0
  %363 = vmatpush1.msra.mxu0 %v317
  %364 = vmatprep.subr.mxu0 0.0
  %365 = vmatpush2.msra.mxu0 0.0
  %366 = vmatprep.subr.mxu0 0.0
  %367 = vmatpush2.msra.mxu0 0.0
  %368 = vmatprep.subr.mxu0 0.0
  %369 = vmatpush2.msra.mxu0 0.0
  %370 = vmatprep.subr.mxu0 0.0
  %371 = vmatpush2.msra.mxu0 0.0
  %372 = vmatprep.subr.mxu0 0.0
  %373 = vmatpush2.msra.mxu0 0.0
  %374 = vmatprep.subr.mxu0 0.0
  %375 = vmatpush2.msra.mxu0 0.0
  %376 = vmatprep.subr.mxu0 0.0
  %377 = vmatpush2.msra.mxu0 0.0
  %378 = vmatprep.subr.mxu0 0.0
  %379 = vmatpush2.msra.mxu0 0.0
  %380 = vmatprep.subr.mxu0 0.0
  %381 = vmatpush2.msra.mxu0 0.0
  %382 = vmatprep.subr.mxu0 0.0
  %383 = vmatpush2.msra.mxu0 0.0
  %384 = vmatprep.subr.mxu0 0.0
  %385 = vmatpush2.msra.mxu0 0.0
  %386 = vmatprep.subr.mxu0 0.0
  %387 = vmatpush2.msra.mxu0 0.0
  %388 = vmatprep.subr.mxu0 0.0
  %389 = vmatpush2.msra.mxu0 0.0
  %390 = vmatprep.subr.mxu0 0.0
  %391 = vmatpush2.msra.mxu0 0.0
  %392 = vmatprep.subr.mxu0 0.0
  %393 = vmatpush2.msra.mxu0 0.0
  %394 = vmatprep.subr.mxu0 0.0
  %395 = vmatpush2.msra.mxu0 0.0
  %396 = vmatprep.mubr.f32.mxu0 0.0
  %397 = vmatmul.mubr.f32.gmra.mxu0 %v330
  %v398 = vpop.f32.mrf.mxu0
  %v399 = vadd.f32 %v326, %v398
  %v400 = vpop.f32.mrf.mxu0
  %401 = vdwg.mxu0
  %402 = vst [vmem:[%s10] sm:$0xff] %v399
  // Predicated region
  $region42: #{rnn_forward.1} parent=0 // pred_check
    _
  $region43: #{rnn_forward.1} parent=0 // pred_check_branch
    %404 = sbr.rel (0) target = $region45
  $region44: #{rnn_forward.1} parent=0 // pred_region
    _
  $region45: #{rnn_forward.1} parent=0 // pred_fallthru
    _
  // Predicated region
  $region46: #{rnn_forward.1} parent=0 // pred_check
    _
  $region47: #{rnn_forward.1} parent=0 // pred_check_branch
    %406 = sbr.rel (0) target = $region49
  $region48: #{rnn_forward.1} parent=0 // pred_region
    _
  $region49: #{rnn_forward.1} parent=0 // pred_fallthru
    _

</llo_original>
